<compile_context>
chip_gen: v6e
topology: v6e:2x2x1
jax: 0.10.0
libtpu: 0.0.40
codegen_flags: <defaults>
</compile_context>

<pallas_src>
import functools

import jax
import jax.numpy as jnp
from jax import lax
from jax.experimental import pallas as pl
from jax.experimental.pallas import tpu as pltpu

# torchaudio ComputeDeltas defaults: win_length = 5 -> N = 2, denom = 10.
WIN_LENGTH = 5
N = (WIN_LENGTH - 1) // 2
DENOM = float(2 * sum(i * i for i in range(1, N + 1)))


# ----------------------------- shared in-kernel helpers -----------------------------

def _fir_shrink(v):
    """One delta FIR along rows.  v: (M, D) f32 -> (M - 2N, D) f32.

    out[r] = sum_{j=1..N} j * (v[r + N + j] - v[r + N - j]) / DENOM
    """
    m = v.shape[0]
    lout = m - 2 * N
    acc = None
    for j in range(1, N + 1):
        diff = v[N + j:N + j + lout, :] - v[N - j:N - j + lout, :]
        term = diff if j == 1 else float(j) * diff
        acc = term if acc is None else acc + term
    return acc * (1.0 / DENOM)


def _replicate_top(cur, pred, k):
    """Where `pred`: rows [0, k) <- row k (replicate toward the start)."""
    m = cur.shape[0]
    row = lax.broadcasted_iota(jnp.int32, (m, 1), 0)
    return jnp.where(jnp.logical_and(pred, row < k), cur[k:k + 1, :], cur)


def _replicate_bottom(cur, pred, start):
    """Where `pred`: rows [start, M) <- row start - 1 (replicate toward the end)."""
    m = cur.shape[0]
    row = lax.broadcasted_iota(jnp.int32, (m, 1), 0)
    return jnp.where(jnp.logical_and(pred, row >= start), cur[start - 1:start, :], cur)


# --------------------------------- tiled (main) path --------------------------------

def _delta_tiled_kernel(center_ref, lhalo_ref, rhalo_ref, out_ref, *,
                        order, tile_t, H, HB, num_tiles, last_len, D):
    i = pl.program_id(0)

    # Order-0 passthrough band: straight from the input block (no f32 round trip),
    # stored into its own column band (no (order+1)*D-wide f32 concat temporary).
    out_ref[:, 0:D] = center_ref[...].astype(out_ref.dtype)

    # Assemble the halo window as a value; window row r <-> time t = i*tile_t - H + r.
    w = jnp.concatenate(
        [lhalo_ref[HB - H:, :], center_ref[...], rhalo_ref[:H, :]], axis=0
    ).astype(jnp.float32)

    is_first = i == 0
    is_last = i == num_tiles - 1
    has_2nd_last_fix = (last_len < H) and (num_tiles >= 2)
    is_2nd_last = i == num_tiles - 2

    # Replicate padding at the true sequence boundaries (edge tiles only, predicated;
    # this also overwrites any garbage rows of partial / clamped halo blocks).
    w = _replicate_top(w, is_first, H)
    w = _replicate_bottom(w, is_last, H + last_len)
    if has_2nd_last_fix:
        w = _replicate_bottom(w, is_2nd_last, H + tile_t + last_len)

    bottoms = [(is_last, H + last_len)]
    if has_2nd_last_fix:
        bottoms.append((is_2nd_last, H + tile_t + last_len))

    cur = w
    for o in range(1, order + 1):
        cur = _fir_shrink(cur)      # row r now maps to t = i*tile_t - (H - o*N) + r
        halo = H - o * N
        out_ref[:, o * D:(o + 1) * D] = cur[halo:halo + tile_t, :].astype(out_ref.dtype)
        if o < order:
            # torchaudio replicates every delta at the true sequence edges before the
            # next order; only edge tiles are affected (predicated, static rows).
            cur = _replicate_top(cur, is_first, halo)
            for pred, vb in bottoms:
                vb_o = vb - o * N
                if 0 < vb_o < cur.shape[0]:
                    cur = _replicate_bottom(cur, pred, vb_o)


def _delta_tiled(x, order, tile_t):
    T, D = x.shape
    H = order * N
    HB = max(8, ((H + 7) // 8) * 8)          # 8-row-aligned halo block height
    assert tile_t % HB == 0 and tile_t >= HB
    R = tile_t // HB                          # halo blocks per tile
    num_tiles = pl.cdiv(T, tile_t)
    last_len = T - (num_tiles - 1) * tile_t
    n_hb = pl.cdiv(T, HB)                     # number of HB-row halo blocks in x
    d_out = (order + 1) * D

    def lh_map(i):
        return (jnp.maximum(i * R - 1, 0), 0)          # clamped at the front

    def rh_map(i):
        return (jnp.minimum((i + 1) * R, n_hb - 1), 0)  # clamped at the back

    kernel = functools.partial(
        _delta_tiled_kernel, order=order, tile_t=tile_t, H=H, HB=HB,
        num_tiles=num_tiles, last_len=last_len, D=D)

    bx = x.dtype.itemsize
    cost = pl.CostEstimate(
        flops=6 * order * T * D,
        transcendentals=0,
        bytes_accessed=T * D * bx + T * d_out * bx + 2 * num_tiles * HB * D * bx)

    return pl.pallas_call(
        kernel,
        out_shape=jax.ShapeDtypeStruct((T, d_out), x.dtype),
        grid=(num_tiles,),
        in_specs=[
            pl.BlockSpec((tile_t, D), lambda i: (i, 0)),   # center rows of the tile
            pl.BlockSpec((HB, D), lh_map),                 # 8-row-aligned left halo
            pl.BlockSpec((HB, D), rh_map),                 # 8-row-aligned right halo
        ],
        out_specs=pl.BlockSpec((tile_t, d_out), lambda i: (i, 0)),
        compiler_params=pltpu.CompilerParams(
            dimension_semantics=("parallel",),             # tiles are independent
        ),
        cost_estimate=cost,
    )(x, x, x)


# ------------------------------ tiny-input fallback path -----------------------------

def _delta_small_kernel(xpad_ref, out_ref, *, order, T, H, D):
    out_ref[:, 0:D] = xpad_ref[H:H + T, :].astype(out_ref.dtype)
    cur = xpad_ref[...].astype(jnp.float32)
    for o in range(1, order + 1):
        cur = _fir_shrink(cur)
        halo = H - o * N
        out_ref[:, o * D:(o + 1) * D] = cur[halo:halo + T, :].astype(out_ref.dtype)
        if o < order:
            cur = _replicate_top(cur, True, halo)
            cur = _replicate_bottom(cur, True, halo + T)


def _delta_small(x, order):
    # Only used for tiny T (< one halo block); the pad copy is negligible there.
    T, D = x.shape
    H = order * N
    d_out = (order + 1) * D
    xpad = jnp.concatenate(
        [jnp.broadcast_to(x[:1], (H, D)), x, jnp.broadcast_to(x[-1:], (H, D))], axis=0)
    kernel = functools.partial(_delta_small_kernel, order=order, T=T, H=H, D=D)
    return pl.pallas_call(
        kernel,
        out_shape=jax.ShapeDtypeStruct((T, d_out), x.dtype),
        grid=(1,),
        in_specs=[pl.BlockSpec((T + 2 * H, D), lambda i: (0, 0))],
        out_specs=pl.BlockSpec((T, d_out), lambda i: (0, 0)),
    )(xpad)


# ------------------------------------- wrapper ---------------------------------------

def delta_features(x, order=1, tile_t=1024):
    """Equivalent of Delta.forward: concat x with its deltas up to `order`. x: [T, D]."""
    if x.ndim != 2:
        raise ValueError(f"expected [T, D] input, got shape {x.shape}")
    if order == 0:
        return x
    T, D = x.shape
    H = order * N
    HB = max(8, ((H + 7) // 8) * 8)
    if T < HB:
        return _delta_small(x, order)

    # Tile size from the real VMEM working set (~12 MiB target, fits the default
    # scoped VMEM on v5e/v6e/v7x): double-buffered in/out blocks + f32 temporaries.
    bx = x.dtype.itemsize
    bytes_per_row = 2 * D * bx + 2 * (order + 1) * D * bx + 5 * D * 4
    cap = max(HB, ((12 * 1024 * 1024) // bytes_per_row) // HB * HB)

    max_tt = min(int(tile_t), cap, (T // HB) * HB)
    max_tt = max(HB, (max_tt // HB) * HB)
    # Aim for >= ~8 grid steps (v7x megacore balance) while keeping tiles >= ~512 rows
    # when possible (HBM roofline on v5e/v6e).
    balance = ((pl.cdiv(T, 8) + HB - 1) // HB) * HB
    min_tt = min(max((512 // HB) * HB, HB), max_tt)
    tt = max(min(balance, max_tt), min_tt)
    return _delta_tiled(x, order, tt)


# ------------------------------------ self-test ---------------------------------------

def _reference_delta_features(x, order):
    """Pure-JAX reference of the torchaudio ComputeDeltas chain (replicate padding)."""
    def one(f):
        T = f.shape[0]
        fpad = jnp.concatenate(
            [jnp.broadcast_to(f[:1], (N,) + f.shape[1:]), f,
             jnp.broadcast_to(f[-1:], (N,) + f.shape[1:])], axis=0)
        out = jnp.zeros(f.shape, jnp.float32)
        for j in range(2 * N + 1):
            out = out + ((j - N) / DENOM) * fpad[j:j + T].astype(jnp.float32)
        return out

    feats = [x.astype(jnp.float32)]
    for _ in range(order):
        feats.append(one(feats[-1]))
    return jnp.concatenate(feats, axis=-1).astype(x.dtype)


if __name__ == "__main__":
    key = jax.random.PRNGKey(0)

    cases = [
        # (T,    D,  order, tile_t)
        (16,    32, 1, 1024),   # single-tile tiled path (num_tiles == 1)
        (1000,  80, 1, 256),    # tiled path, order 1, 4 tiles, ragged last tile
        (194,   40, 2, 64),     # tiled path, order 2, 2-row last tile (< halo)
        (130,   40, 2, 128),    # 2 tiles, last tile shorter than halo
        (7,     24, 2, 64),     # tiny input -> small fallback path
    ]
    for idx, (T, D, order, tile_t) in enumerate(cases):
        key, sub = jax.random.split(key)
        x = jax.random.normal(sub, (T, D), dtype=jnp.float32)

        out = jax.block_until_ready(delta_features(x, order=order, tile_t=tile_t))
        assert out.shape == (T, (order + 1) * D), (idx, out.shape)

        ref = _reference_delta_features(x, order)
        assert jnp.allclose(out[:, :D], x), f"case {idx}: passthrough columns mismatch"
        err = jnp.max(jnp.abs(out - ref))
        assert jnp.allclose(out, ref, atol=1e-4, rtol=1e-4), f"case {idx}: max err {err}"

    print("KERNEL_OK")
</pallas_src>

<mosaic_0001>
module attributes {stable_mosaic.version = 11 : i64} {
  func.func @_delta_tiled_kernel(%arg0: i32, %arg1: memref<16x32xf32, #tpu.memory_space<vmem>>, %arg2: memref<8x32xf32, #tpu.memory_space<vmem>>, %arg3: memref<8x32xf32, #tpu.memory_space<vmem>>, %arg4: memref<16x64xf32, #tpu.memory_space<vmem>>) attributes {dimension_semantics = [#tpu.dimension_semantics<parallel>], iteration_bounds = array<i64: 1>, scalar_prefetch = 0 : i64, scratch_operands = 0 : i64, tpu.core_type = #tpu.core_type<tc>, window_params = [{transform_indices = @transform_0, window_bounds = array<i64: 16, 32>}, {transform_indices = @transform_1, window_bounds = array<i64: 8, 32>}, {transform_indices = @transform_2, window_bounds = array<i64: 8, 32>}, {transform_indices = @transform_3, window_bounds = array<i64: 16, 64>}]} {
    %c0 = arith.constant 0 : index
    %c0_0 = arith.constant 0 : index
    %0 = vector.load %arg1[%c0, %c0_0] : memref<16x32xf32, #tpu.memory_space<vmem>>, vector<16x32xf32>
    %c0_1 = arith.constant 0 : index
    %c0_2 = arith.constant 0 : index
    %1 = vector.load %arg4[%c0_1, %c0_2] : memref<16x64xf32, #tpu.memory_space<vmem>>, vector<16x32xf32>
    tpu.vector_store %arg4[%c0_1, %c0_2], %0 {strides = array<i32>} : memref<16x64xf32, #tpu.memory_space<vmem>>, vector<16x32xf32>,
    %c6 = arith.constant 6 : index
    %c0_3 = arith.constant 0 : index
    %2 = vector.load %arg2[%c6, %c0_3] : memref<8x32xf32, #tpu.memory_space<vmem>>, vector<2x32xf32>
    %c0_4 = arith.constant 0 : index
    %c0_5 = arith.constant 0 : index
    %3 = vector.load %arg1[%c0_4, %c0_5] : memref<16x32xf32, #tpu.memory_space<vmem>>, vector<16x32xf32>
    %c0_6 = arith.constant 0 : index
    %c0_7 = arith.constant 0 : index
    %4 = vector.load %arg3[%c0_6, %c0_7] : memref<8x32xf32, #tpu.memory_space<vmem>>, vector<2x32xf32>
    %5 = tpu.concatenate %2, %3, %4 in 0 : vector<2x32xf32>, vector<16x32xf32>, vector<2x32xf32> -> vector<20x32xf32>
    %c0_i32 = arith.constant 0 : i32
    %6 = arith.cmpi eq, %arg0, %c0_i32 : i32
    %c0_i32_8 = arith.constant 0 : i32
    %7 = arith.cmpi eq, %arg0, %c0_i32_8 : i32
    %8 = tpu.iota {dimensions = array<i32: 0>} : vector<20x1xi32>
    %c2_i32 = arith.constant 2 : i32
    %9 = vector.broadcast %c2_i32 : i32 to vector<20x1xi32>
    %10 = arith.cmpi slt, %8, %9 : vector<20x1xi32>
    %11 = vector.broadcast %6 : i1 to vector<20x1xi1>
    %12 = arith.andi %11, %10 : vector<20x1xi1>
    %13 = vector.extract_strided_slice %5 {offsets = [2, 0], sizes = [1, 32], strides = [1, 1]} : vector<20x32xf32> to vector<1x32xf32>
    %14 = vector.shape_cast %12 : vector<20x1xi1> to vector<20x1xi1>
    %15 = vector.broadcast %14 : vector<20x1xi1> to vector<20x32xi1>
    %16 = vector.shape_cast %13 : vector<1x32xf32> to vector<1x32xf32>
    %17 = vector.broadcast %16 : vector<1x32xf32> to vector<20x32xf32>
    %18 = arith.select %15, %17, %5 : vector<20x32xi1>, vector<20x32xf32>
    %19 = tpu.iota {dimensions = array<i32: 0>} : vector<20x1xi32>
    %c18_i32 = arith.constant 18 : i32
    %20 = vector.broadcast %c18_i32 : i32 to vector<20x1xi32>
    %21 = arith.cmpi sge, %19, %20 : vector<20x1xi32>
    %22 = vector.broadcast %7 : i1 to vector<20x1xi1>
    %23 = arith.andi %22, %21 : vector<20x1xi1>
    %24 = vector.extract_strided_slice %18 {offsets = [17, 0], sizes = [1, 32], strides = [1, 1]} : vector<20x32xf32> to vector<1x32xf32>
    %25 = vector.shape_cast %23 : vector<20x1xi1> to vector<20x1xi1>
    %26 = vector.broadcast %25 : vector<20x1xi1> to vector<20x32xi1>
    %27 = vector.shape_cast %24 : vector<1x32xf32> to vector<1x32xf32>
    %28 = vector.broadcast %27 : vector<1x32xf32> to vector<20x32xf32>
    %29 = arith.select %26, %28, %18 : vector<20x32xi1>, vector<20x32xf32>
    %30 = vector.extract_strided_slice %29 {offsets = [3, 0], sizes = [16, 32], strides = [1, 1]} : vector<20x32xf32> to vector<16x32xf32>
    %31 = vector.extract_strided_slice %29 {offsets = [1, 0], sizes = [16, 32], strides = [1, 1]} : vector<20x32xf32> to vector<16x32xf32>
    %32 = arith.subf %30, %31 : vector<16x32xf32>
    %33 = vector.extract_strided_slice %29 {offsets = [4, 0], sizes = [16, 32], strides = [1, 1]} : vector<20x32xf32> to vector<16x32xf32>
    %34 = vector.extract_strided_slice %29 {offsets = [0, 0], sizes = [16, 32], strides = [1, 1]} : vector<20x32xf32> to vector<16x32xf32>
    %35 = arith.subf %33, %34 : vector<16x32xf32>
    %cst = arith.constant 2.000000e+00 : f32
    %36 = vector.broadcast %cst : f32 to vector<16x32xf32>
    %37 = arith.mulf %36, %35 : vector<16x32xf32>
    %38 = arith.addf %32, %37 : vector<16x32xf32>
    %cst_9 = arith.constant 1.000000e-01 : f32
    %39 = vector.broadcast %cst_9 : f32 to vector<16x32xf32>
    %40 = arith.mulf %38, %39 : vector<16x32xf32>
    %c0_10 = arith.constant 0 : index
    %c32 = arith.constant 32 : index
    %41 = vector.load %arg4[%c0_10, %c32] : memref<16x64xf32, #tpu.memory_space<vmem>>, vector<16x32xf32>
    tpu.vector_store %arg4[%c0_10, %c32], %40 {strides = array<i32>} : memref<16x64xf32, #tpu.memory_space<vmem>>, vector<16x32xf32>,
    return
  }
  func.func @transform_0(%arg0: i32) -> (i32, i32) {
    %c0_i32 = arith.constant 0 : i32
    %c0_i32_0 = arith.constant 0 : i32
    return %arg0, %c0_i32 : i32, i32
  }
  func.func @transform_1(%arg0: i32) -> (i32, i32) {
    %c2_i32 = arith.constant 2 : i32
    %0 = arith.muli %arg0, %c2_i32 : i32
    %c1_i32 = arith.constant 1 : i32
    %1 = arith.subi %0, %c1_i32 : i32
    %c0_i32 = arith.constant 0 : i32
    %2 = arith.maxsi %1, %c0_i32 : i32
    %c0_i32_0 = arith.constant 0 : i32
    %c0_i32_1 = arith.constant 0 : i32
    return %2, %c0_i32_0 : i32, i32
  }
  func.func @transform_2(%arg0: i32) -> (i32, i32) {
    %c1_i32 = arith.constant 1 : i32
    %0 = arith.addi %arg0, %c1_i32 : i32
    %c2_i32 = arith.constant 2 : i32
    %1 = arith.muli %0, %c2_i32 : i32
    %c1_i32_0 = arith.constant 1 : i32
    %2 = arith.minsi %1, %c1_i32_0 : i32
    %c0_i32 = arith.constant 0 : i32
    %c0_i32_1 = arith.constant 0 : i32
    return %2, %c0_i32 : i32, i32
  }
  func.func @transform_3(%arg0: i32) -> (i32, i32) {
    %c0_i32 = arith.constant 0 : i32
    %c0_i32_0 = arith.constant 0 : i32
    return %arg0, %c0_i32 : i32, i32
  }
}

</mosaic_0001>

<llo_original>
// kernel: tpu_custom_call.1
$region0: #{tpu_custom_call.1}
  #allocation0 [shape = 'u32[]', space=smem, size = 0x4, offset = 0x4, fixed_abs, tag = 'smem constant byte address 0x4 - core index']
  #allocation1 [shape = 'u32[144,128]{1,0:T(1,128)}', space=vmem, size = 0x12000, scoped, tag = 'internal scratch']
  %s0 = inlined_call_operand.hbm [shape: f32[16,32], index: 0, kind: input, shape index: {}]
  %s1 = inlined_call_operand.hbm [shape: f32[16,32], index: 1, kind: input, shape index: {}]
  %s2 = inlined_call_operand.hbm [shape: f32[16,32], index: 2, kind: input, shape index: {}]
  %s3 = inlined_call_operand.hbm [shape: f32[16,64], index: 3, kind: output, shape index: {}]
  %s4 = sld [smem:[#allocation0]]
  $region34: #{tpu_custom_call.1} parent=0
    _
  %s6 = ssub.s32 1, %s4
  %s7 = scalar_select 0, %s6, %s4
  $region1: #{tpu_custom_call.1} parent=0
    #allocation2 [shape = 'u8[8192]{0}', space=vmem, size = 0x2000, scoped, tag = 'input window, operand 0, single buffered']
    #allocation3 [shape = 's32[1]{0}', space=sflag, size = 0x4, scoped, tag = 'scoped memory for tpu_custom_call.1']
    #allocation4 [shape = 's32[1]{0}', space=sflag, size = 0x4, scoped, tag = 'scoped memory for tpu_custom_call.1']
    #allocation5 [shape = 'u8[4096]{0}', space=vmem, size = 0x1000, scoped, tag = 'input window, operand 1, single buffered']
    #allocation6 [shape = 's32[1]{0}', space=sflag, size = 0x4, scoped, tag = 'scoped memory for tpu_custom_call.1']
    #allocation7 [shape = 'u8[4096]{0}', space=vmem, size = 0x1000, scoped, tag = 'input window, operand 2, single buffered']
    #allocation8 [shape = 'u8[8192]{0}', space=vmem, size = 0x2000, scoped, tag = 'output window, operand 0, single buffered']
    %8 = vsyncpa [#allocation3], 0
    %9 = vsyncpa [#allocation6], 0
    %10 = vsyncpa [#allocation4], 0
    // Predicated region
    $region2: #{tpu_custom_call.1} parent=1 // pred_check
      _
    $region3: #{tpu_custom_call.1} parent=1 // pred_check_branch
      %12 = sbr.rel (0) target = $region5
    $region4: #{tpu_custom_call.1} parent=1 // pred_region
      %s14 = ssub.s32 256, 256
      %15 = vsyncadd [#allocation3], %s14
      %s16 = sshll.u32 [#allocation2], 4
      %s17 = int_to_ptr.vmem [resolvable:$true] %s16
      %22 = dma.hbm_to_vmem [thread:$0]  %s0, 256, %s17, [#allocation3], 128, 128, 8
    $region5: #{tpu_custom_call.1} parent=1 // pred_fallthru
      _
    // Predicated region
    $region6: #{tpu_custom_call.1} parent=1 // pred_check
      _
    $region7: #{tpu_custom_call.1} parent=1 // pred_check_branch
      %24 = sbr.rel (0) target = $region9
    $region8: #{tpu_custom_call.1} parent=1 // pred_region
      %s25 = smul.u32 0, 2
      %s26 = ssub.s32 %s25, 1
      %p27 = scmp.gt.s32.totalorder %s26, 0
      %s28 = scalar_select %p27, %s26, 0
      %s30 = ssub.s32 128, 128
      %31 = vsyncadd [#allocation6], %s30
      %s32 = smul.addr %s28, 128
      %s33 = scalar_lea.hbm %s1, %s32
      %s35 = sshll.u32 [#allocation5], 4
      %s36 = int_to_ptr.vmem [resolvable:$true] %s35
      %38 = dma.hbm_to_vmem [thread:$0]  %s33, 128, %s36, [#allocation6]
    $region9: #{tpu_custom_call.1} parent=1 // pred_fallthru
      _
    // Predicated region
    $region10: #{tpu_custom_call.1} parent=1 // pred_check
      _
    $region11: #{tpu_custom_call.1} parent=1 // pred_check_branch
      %40 = sbr.rel (0) target = $region13
    $region12: #{tpu_custom_call.1} parent=1 // pred_region
      %s41 = sadd.s32 0, 1
      %s42 = smul.u32 %s41, 2
      %p43 = scmp.lt.s32.totalorder %s42, 1
      %s44 = scalar_select %p43, %s42, 1
      %s46 = ssub.s32 128, 128
      %47 = vsyncadd [#allocation6], %s46
      %s48 = smul.addr %s44, 128
      %s49 = scalar_lea.hbm %s2, %s48
      %s51 = sshll.u32 [#allocation7], 4
      %s52 = int_to_ptr.vmem [resolvable:$true] %s51
      %54 = dma.hbm_to_vmem [thread:$0]  %s49, 128, %s52, [#allocation6]
    $region13: #{tpu_custom_call.1} parent=1 // pred_fallthru
      _
    // Predicated region
    $region14: #{tpu_custom_call.1} parent=1 // pred_check
      _
    $region15: #{tpu_custom_call.1} parent=1 // pred_check_branch
      %56 = sbr.rel (0) target = $region17
    $region16: #{tpu_custom_call.1} parent=1 // pred_region
      %57 = dma.done [#allocation3], 256
    $region17: #{tpu_custom_call.1} parent=1 // pred_fallthru
      _
    // Predicated region
    $region18: #{tpu_custom_call.1} parent=1 // pred_check
      _
    $region19: #{tpu_custom_call.1} parent=1 // pred_check_branch
      %59 = sbr.rel (0) target = $region21
    $region20: #{tpu_custom_call.1} parent=1 // pred_region
      %60 = dma.done [#allocation6], 128
    $region21: #{tpu_custom_call.1} parent=1 // pred_fallthru
      _
    // Predicated region
    $region22: #{tpu_custom_call.1} parent=1 // pred_check
      _
    $region23: #{tpu_custom_call.1} parent=1 // pred_check_branch
      %62 = sbr.rel (0) target = $region25
    $region24: #{tpu_custom_call.1} parent=1 // pred_region
      %63 = dma.done [#allocation6], 128
    $region25: #{tpu_custom_call.1} parent=1 // pred_fallthru
      _
    %s64 = smul.u32 0, 2
    %s65 = ssub.s32 %s64, 1
    %p66 = scmp.gt.s32.totalorder %s65, 0
    %s67 = scalar_select %p66, %s65, 0
    %s68 = sadd.s32 0, 1
    %s69 = smul.u32 %s68, 2
    %p70 = scmp.lt.s32.totalorder %s69, 1
    %s71 = scalar_select %p70, %s69, 1
    %v72 = vld [vmem:[#allocation2] sm:$0xff]
    %v73 = vld [vmem:[#allocation2 + $0x8] sm:$0xff]
    %vm74 = vcmask 261120
    %75 = vst.msk [vmem:[#allocation8] sm:$0xff] %vm74, %v72
    %76 = vst.msk [vmem:[#allocation8 + $0x8] sm:$0xff] %vm74, %v73
    %v77 = vld [vmem:[#allocation5 + $0x6] sm:$0x3]
    %v78 = vld [vmem:[#allocation2] sm:$0xff]
    %v79 = vld [vmem:[#allocation2 + $0x8] sm:$0xff]
    %v80 = vld [vmem:[#allocation7] sm:$0x3]
    %vm83 = vcmask 1041408
    %v84 = vrot.slane %v78, 6
    %v85 = vrot.slane %v79, 6
    %v86 = vsel %vm83, %v84, %v85
    %v91 = vrot.slane %v80, 6
    %v93 = vsel %vm83, %v77, %v84
    %v94 = vsel %vm83, %v85, %v91
    %p95 = scmp.eq.s32.totalorder 0, 0
    %v96 = vlaneseq
    %v97 = vshrl.u32 %v96, 7
    %v98 = vadd.s32 %v97, 8
    %v99 = vadd.s32 %v97, 16
    %vm100 = vcmp.lt.s32.totalorder %v97, 2
    %vm101 = vcmp.lt.s32.totalorder %v98, 2
    %vm102 = vcmp.lt.s32.totalorder %v99, 2
    %s103 = scalar_select %p95, 1, 0
    %v104 = vstv %s103
    %vm105 = vcmp.eq.s32.totalorder %v104, 1
    %vm106 = vmand %vm105, %vm100
    %vm107 = vmand %vm105, %vm101
    %vm108 = vmand %vm105, %vm102
    %v109 = vsel %vm106, 1, 0
    %v110 = vsel %vm107, 1, 0
    %v111 = vsel %vm108, 1, 0
    %vm112 = vcmp.eq.s32.totalorder %v109, 1
    %vm113 = vcmp.eq.s32.totalorder %v110, 1
    %vm114 = vcmp.eq.s32.totalorder %v111, 1
    %v115 = vlaneseq
    %v116 = vshrl.u32 %v115, 7
    %v117 = vsub.s32 2, %v116
    %v118 = vrot.slane %v93, %v117
    %v119 = vsel %vm112, %v118, %v93
    %v120 = vsel %vm113, %v118, %v86
    %v121 = vsel %vm114, %v118, %v94
    %vm122 = vcmp.ge.s32.totalorder %v97, 18
    %vm123 = vcmp.ge.s32.totalorder %v98, 18
    %vm124 = vcmp.ge.s32.totalorder %v99, 18
    %vm125 = vmand %vm105, %vm122
    %vm126 = vmand %vm105, %vm123
    %vm127 = vmand %vm105, %vm124
    %v128 = vsel %vm125, 1, 0
    %v129 = vsel %vm126, 1, 0
    %v130 = vsel %vm127, 1, 0
    %vm131 = vcmp.eq.s32.totalorder %v128, 1
    %vm132 = vcmp.eq.s32.totalorder %v129, 1
    %vm133 = vcmp.eq.s32.totalorder %v130, 1
    %v134 = vlaneseq
    %v135 = vshrl.u32 %v134, 7
    %v136 = vsub.s32 1, %v135
    %v137 = vrot.slane %v121, %v136
    %v138 = vsel %vm131, %v137, %v119
    %v139 = vsel %vm132, %v137, %v120
    %v140 = vsel %vm133, %v137, %v121
    %v144 = vrot.slane %v138, 6
    %v145 = vrot.slane %v139, 6
    %v146 = vsel %vm83, %v144, %v145
    %v147 = vrot.slane %v140, 6
    %v148 = vsel %vm83, %v145, %v147
    %v152 = vsub.f32 %v138, %v144
    %v153 = vsub.f32 %v139, %v146
    %v154 = vsub.f32 %v140, %v148
    %vm155 = vcmask 1043456
    %v156 = vrot.slane %v138, 4
    %v157 = vrot.slane %v139, 4
    %v158 = vsel %vm155, %v156, %v157
    %v162 = vsub.f32 %v138, %v156
    %v163 = vsub.f32 %v139, %v158
    %v164 = vsub.f32 %v140, %v157
    %v165 = vmul.f32 %v162, 2.0
    %v166 = vmul.f32 %v163, 2.0
    %v167 = vmul.f32 %v164, 2.0
    %vm171 = vcmask 1046528
    %v172 = vrot.slane %v165, 1
    %v173 = vrot.slane %v166, 1
    %v174 = vsel %vm171, %v172, %v173
    %v175 = vrot.slane %v167, 1
    %v176 = vsel %vm171, %v173, %v175
    %v180 = vadd.f32 %v152, %v174
    %v181 = vadd.f32 %v153, %v176
    %v182 = vadd.f32 %v154, %v175
    %v183 = vmul.f32 %v180, 0.1
    %v184 = vmul.f32 %v181, 0.1
    %v185 = vmul.f32 %v182, 0.1
    %189 = vrot.lane.b32.xlu0 %v183, 32
    %v190 = vpop.permute.xlu0 %189
    %191 = vrot.lane.b32.xlu0 %v184, 32
    %v192 = vpop.permute.xlu0 %191
    %193 = vrot.lane.b32.xlu0 %v185, 32
    %v194 = vpop.permute.xlu0 %193
    %vm198 = vcmask 523523
    %199 = vst.msk [vmem:[#allocation8 - $0x3] sm:$0xf8] %vm198, %v190
    %vm200 = vcmask 523520
    %201 = vst.msk [vmem:[#allocation8 + $0x5] sm:$0xff] %vm200, %v192
    %vm202 = vcmask 518400
    %203 = vst.msk [vmem:[#allocation8 + $0xd] sm:$0x7] %vm202, %v194
    // Predicated region
    $region26: #{tpu_custom_call.1} parent=1 // pred_check
      _
    $region27: #{tpu_custom_call.1} parent=1 // pred_check_branch
      %205 = sbr.rel (0) target = $region29
    $region28: #{tpu_custom_call.1} parent=1 // pred_region
      %s207 = ssub.s32 256, 256
      %208 = vsyncadd [#allocation4], %s207
      %s209 = sshll.u32 [#allocation8], 4
      %s210 = int_to_ptr.vmem [resolvable:$true] %s209
      %215 = dma.vmem_to_hbm [thread:$0]  %s210, 256, %s3, [#allocation4], 128, 128, 8
    $region29: #{tpu_custom_call.1} parent=1 // pred_fallthru
      _
    // Predicated region
    $region30: #{tpu_custom_call.1} parent=1 // pred_check
      _
    $region31: #{tpu_custom_call.1} parent=1 // pred_check_branch
      %217 = sbr.rel (0) target = $region33
    $region32: #{tpu_custom_call.1} parent=1 // pred_region
      %218 = dma.done [#allocation4], 256
    $region33: #{tpu_custom_call.1} parent=1 // pred_fallthru
      _
    %219 = vsyncpa [#allocation3], 1
    %220 = vsyncpa [#allocation6], 1
    %221 = vsyncpa [#allocation4], 1

</llo_original>
